<compile_context>
chip_gen: v5e
topology: v5e:2x2
jax: 0.10.0
libtpu: 0.0.40
codegen_flags: <defaults>
</compile_context>

<pallas_src>
import functools

import jax
import jax.numpy as jnp
from jax import lax
from jax.experimental import pallas as pl
from jax.experimental.pallas import tpu as pltpu


# ---------------------------------------------------------------------------
# Fused kernel: QKV projection + per-head attention + output projection
# ---------------------------------------------------------------------------

def _fused_attention_kernel(x_ref, wqkv_ref, wout_ref, bout_ref, o_ref, *,
                            heads, dim_head, scale):
    # Block shapes:
    #   x_ref    : (1, n, dim)        one batch element per grid step
    #   wqkv_ref : (dim, 3*inner)     resident across the grid (same block idx)
    #   wout_ref : (inner, dim)
    #   bout_ref : (1, dim)
    #   o_ref    : (1, n, dim)
    x = x_ref[0]                                   # (n, dim)  f32
    n = x.shape[0]
    dim_out = o_ref.shape[2]
    inner = heads * dim_head

    # One big lane-dense QKV projection on the MXU (N = 3*inner lanes).
    # TODO(synk): cast MXU operands to bf16 (keep f32 accumulation) for large
    # shapes; kept f32 here for exact parity at these tiny test shapes.
    qkv = jnp.dot(x, wqkv_ref[...], preferred_element_type=jnp.float32)  # (n, 3*inner)

    # Accumulate the output projection head-by-head:
    #   out @ W_out == sum_h out_h @ W_out[h*d:(h+1)*d, :]
    # so we never materialize / re-transpose a (b, h, n, d) tensor.
    acc = jnp.zeros((n, dim_out), jnp.float32)
    for h in range(heads):                          # static unroll over heads
        lo = h * dim_head
        q = qkv[:, lo:lo + dim_head] * scale        # scale q (n*d muls, not n*n)
        k = qkv[:, inner + lo:inner + lo + dim_head]
        v = qkv[:, 2 * inner + lo:2 * inner + lo + dim_head]

        # q @ k^T without an explicit transpose (contract last dims).
        dots = lax.dot_general(q, k, (((1,), (1,)), ((), ())),
                               preferred_element_type=jnp.float32)       # (n, n)

        # Numerically-stable softmax in f32; reciprocal on the EUP slot.
        m = jnp.max(dots, axis=-1, keepdims=True)
        e = jnp.exp(dots - m)
        attn = e * pl.reciprocal(jnp.sum(e, axis=-1, keepdims=True), approx=True)

        out_h = jnp.dot(attn, v, preferred_element_type=jnp.float32)     # (n, d)
        acc = acc + jnp.dot(out_h, wout_ref[lo:lo + dim_head, :],
                            preferred_element_type=jnp.float32)          # (n, dim)

    o_ref[0] = (acc + bout_ref[...]).astype(o_ref.dtype)

    # TODO(synk): for large seq (n^2 f32 scores > VMEM) restructure the per-head
    # loop as a flash-style online-softmax over kv tiles.


# ---------------------------------------------------------------------------
# Wrapper
# ---------------------------------------------------------------------------

def attention_forward(x, w_qkv, w_out, b_out, *, heads, dim_head):
    """x: (b, n, dim). w_qkv: (dim, 3*inner). w_out: (inner, dim). b_out: (dim,)."""
    b, n, dim = x.shape
    inner = heads * dim_head
    assert w_qkv.shape == (dim, 3 * inner)
    assert w_out.shape == (inner, dim)
    scale = dim_head ** (-0.5)

    kernel = functools.partial(_fused_attention_kernel,
                               heads=heads, dim_head=dim_head, scale=scale)

    return pl.pallas_call(
        kernel,
        out_shape=jax.ShapeDtypeStruct((b, n, dim), x.dtype),
        grid=(b,),
        in_specs=[
            pl.BlockSpec((1, n, dim), lambda i: (i, 0, 0)),       # x tile
            pl.BlockSpec((dim, 3 * inner), lambda i: (0, 0)),     # W_qkv (resident)
            pl.BlockSpec((inner, dim), lambda i: (0, 0)),         # W_out  (resident)
            pl.BlockSpec((1, dim), lambda i: (0, 0)),             # b_out  (resident)
        ],
        out_specs=pl.BlockSpec((1, n, dim), lambda i: (i, 0, 0)),
        compiler_params=pltpu.CompilerParams(
            dimension_semantics=("parallel",)),
    )(x, w_qkv, w_out, b_out.reshape(1, dim))


# ---------------------------------------------------------------------------
# Pure-JAX reference for sanity checking
# ---------------------------------------------------------------------------

def attention_ref(x, w_qkv, w_out, b_out, *, heads, dim_head):
    b, n, dim = x.shape
    inner = heads * dim_head
    scale = dim_head ** (-0.5)
    qkv = x @ w_qkv
    q, k, v = jnp.split(qkv, 3, axis=-1)

    def split(t):
        return t.reshape(b, n, heads, dim_head).transpose(0, 2, 1, 3)

    q, k, v = split(q), split(k), split(v)
    dots = jnp.einsum("bhqd,bhkd->bhqk", q, k) * scale
    attn = jax.nn.softmax(dots, axis=-1)
    out = jnp.einsum("bhqk,bhkd->bhqd", attn, v)
    out = out.transpose(0, 2, 1, 3).reshape(b, n, inner)
    return out @ w_out + b_out


# ---------------------------------------------------------------------------
# Main
# ---------------------------------------------------------------------------

if __name__ == "__main__":
    # Small shapes consistent with the module: dim=32, heads=4, dim_head=16.
    batch, seq, dim = 2, 8, 32
    heads, dim_head = 4, 16
    inner = heads * dim_head

    key = jax.random.PRNGKey(0)
    kx, kqkv, kwo, kbo = jax.random.split(key, 4)

    x = jax.random.normal(kx, (batch, seq, dim), dtype=jnp.float32)
    # PyTorch stores Linear weight as (out, in); we keep the transposed
    # (in, out) layout so the kernel computes x @ W directly.
    w_qkv = jax.random.normal(kqkv, (dim, inner * 3), dtype=jnp.float32) * 0.05
    w_out = jax.random.normal(kwo, (inner, dim), dtype=jnp.float32) * 0.05
    b_out = jax.random.normal(kbo, (dim,), dtype=jnp.float32) * 0.05

    y = attention_forward(x, w_qkv, w_out, b_out, heads=heads, dim_head=dim_head)
    y = jax.block_until_ready(y)

    y_ref = attention_ref(x, w_qkv, w_out, b_out, heads=heads, dim_head=dim_head)
    assert y.shape == (batch, seq, dim)
    # Tolerance loosened slightly for pl.reciprocal(approx=True) in the softmax.
    assert jnp.allclose(y, y_ref, atol=1e-2, rtol=1e-2), "mismatch vs reference"

    print("KERNEL_OK")
</pallas_src>

<mosaic_0001>
module attributes {stable_mosaic.version = 11 : i64} {
  func.func @_fused_attention_kernel(%arg0: i32, %arg1: memref<1x8x32xf32, #tpu.memory_space<vmem>>, %arg2: memref<32x192xf32, #tpu.memory_space<vmem>>, %arg3: memref<64x32xf32, #tpu.memory_space<vmem>>, %arg4: memref<1x32xf32, #tpu.memory_space<vmem>>, %arg5: memref<1x8x32xf32, #tpu.memory_space<vmem>>) attributes {dimension_semantics = [#tpu.dimension_semantics<parallel>], iteration_bounds = array<i64: 2>, scalar_prefetch = 0 : i64, scratch_operands = 0 : i64, tpu.core_type = #tpu.core_type<tc>, window_params = [{transform_indices = @transform_0, window_bounds = array<i64: 1, 8, 32>}, {pipeline_mode = #tpu.pipeline_mode<synchronous>, transform_indices = @transform_1, window_bounds = array<i64: 32, 192>}, {pipeline_mode = #tpu.pipeline_mode<synchronous>, transform_indices = @transform_2, window_bounds = array<i64: 64, 32>}, {pipeline_mode = #tpu.pipeline_mode<synchronous>, transform_indices = @transform_3, window_bounds = array<i64: 1, 32>}, {transform_indices = @transform_4, window_bounds = array<i64: 1, 8, 32>}]} {
    %c0 = arith.constant 0 : index
    %c0_0 = arith.constant 0 : index
    %c0_1 = arith.constant 0 : index
    %0 = vector.load %arg1[%c0, %c0_0, %c0_1] : memref<1x8x32xf32, #tpu.memory_space<vmem>>, vector<1x8x32xf32>
    %1 = vector.shape_cast %0 : vector<1x8x32xf32> to vector<8x32xf32>
    %c0_2 = arith.constant 0 : index
    %c0_3 = arith.constant 0 : index
    %2 = vector.load %arg2[%c0_2, %c0_3] : memref<32x192xf32, #tpu.memory_space<vmem>>, vector<32x192xf32>
    %cst = arith.constant dense<0.000000e+00> : vector<8x192xf32>
    %3 = tpu.matmul %1, %2, %cst {dimension_numbers = #tpu.dot_dimension_numbers<[1], [0], [0], [1], [0, 0, 1, 1], [], []>} : vector<8x32xf32>, vector<32x192xf32>, vector<8x192xf32> -> vector<8x192xf32>
    %cst_4 = arith.constant 0.000000e+00 : f32
    %4 = vector.broadcast %cst_4 : f32 to vector<8x32xf32>
    %5 = vector.extract_strided_slice %3 {offsets = [0, 0], sizes = [8, 16], strides = [1, 1]} : vector<8x192xf32> to vector<8x16xf32>
    %cst_5 = arith.constant 2.500000e-01 : f32
    %6 = vector.broadcast %cst_5 : f32 to vector<8x16xf32>
    %7 = arith.mulf %5, %6 : vector<8x16xf32>
    %8 = vector.extract_strided_slice %3 {offsets = [0, 64], sizes = [8, 16], strides = [1, 1]} : vector<8x192xf32> to vector<8x16xf32>
    %9 = vector.extract_strided_slice %3 {offsets = [0, 128], sizes = [8, 16], strides = [1, 1]} : vector<8x192xf32> to vector<8x16xf32>
    %cst_6 = arith.constant dense<0.000000e+00> : vector<8x8xf32>
    %10 = tpu.matmul %7, %8, %cst_6 {dimension_numbers = #tpu.dot_dimension_numbers<[1], [1], [0], [0], [0, 0, 1, 0], [], []>} : vector<8x16xf32>, vector<8x16xf32>, vector<8x8xf32> -> vector<8x8xf32>
    %cst_7 = arith.constant dense<0xFF800000> : vector<8xf32>
    %11 = vector.multi_reduction <maximumf>, %10, %cst_7 [1] : vector<8x8xf32> to vector<8xf32>
    %12 = vector.shape_cast %11 : vector<8xf32> to vector<8x1xf32>
    %13 = vector.broadcast %12 : vector<8x1xf32> to vector<8x8xf32>
    %14 = arith.subf %10, %13 : vector<8x8xf32>
    %15 = math.exp %14 : vector<8x8xf32>
    %cst_8 = arith.constant dense<0.000000e+00> : vector<8xf32>
    %16 = vector.multi_reduction <add>, %15, %cst_8 [1] : vector<8x8xf32> to vector<8xf32>
    %17 = vector.shape_cast %16 : vector<8xf32> to vector<8x1xf32>
    %18 = tpu.reciprocal %17 {approx = true} : vector<8x1xf32> -> vector<8x1xf32>
    %19 = vector.broadcast %18 : vector<8x1xf32> to vector<8x8xf32>
    %20 = arith.mulf %15, %19 : vector<8x8xf32>
    %cst_9 = arith.constant dense<0.000000e+00> : vector<8x16xf32>
    %21 = tpu.matmul %20, %9, %cst_9 {dimension_numbers = #tpu.dot_dimension_numbers<[1], [0], [0], [1], [0, 0, 1, 1], [], []>} : vector<8x8xf32>, vector<8x16xf32>, vector<8x16xf32> -> vector<8x16xf32>
    %c0_10 = arith.constant 0 : index
    %c0_11 = arith.constant 0 : index
    %22 = vector.load %arg3[%c0_10, %c0_11] : memref<64x32xf32, #tpu.memory_space<vmem>>, vector<16x32xf32>
    %cst_12 = arith.constant dense<0.000000e+00> : vector<8x32xf32>
    %23 = tpu.matmul %21, %22, %cst_12 {dimension_numbers = #tpu.dot_dimension_numbers<[1], [0], [0], [1], [0, 0, 1, 1], [], []>} : vector<8x16xf32>, vector<16x32xf32>, vector<8x32xf32> -> vector<8x32xf32>
    %24 = arith.addf %4, %23 : vector<8x32xf32>
    %25 = vector.extract_strided_slice %3 {offsets = [0, 16], sizes = [8, 16], strides = [1, 1]} : vector<8x192xf32> to vector<8x16xf32>
    %cst_13 = arith.constant 2.500000e-01 : f32
    %26 = vector.broadcast %cst_13 : f32 to vector<8x16xf32>
    %27 = arith.mulf %25, %26 : vector<8x16xf32>
    %28 = vector.extract_strided_slice %3 {offsets = [0, 80], sizes = [8, 16], strides = [1, 1]} : vector<8x192xf32> to vector<8x16xf32>
    %29 = vector.extract_strided_slice %3 {offsets = [0, 144], sizes = [8, 16], strides = [1, 1]} : vector<8x192xf32> to vector<8x16xf32>
    %cst_14 = arith.constant dense<0.000000e+00> : vector<8x8xf32>
    %30 = tpu.matmul %27, %28, %cst_14 {dimension_numbers = #tpu.dot_dimension_numbers<[1], [1], [0], [0], [0, 0, 1, 0], [], []>} : vector<8x16xf32>, vector<8x16xf32>, vector<8x8xf32> -> vector<8x8xf32>
    %cst_15 = arith.constant dense<0xFF800000> : vector<8xf32>
    %31 = vector.multi_reduction <maximumf>, %30, %cst_15 [1] : vector<8x8xf32> to vector<8xf32>
    %32 = vector.shape_cast %31 : vector<8xf32> to vector<8x1xf32>
    %33 = vector.broadcast %32 : vector<8x1xf32> to vector<8x8xf32>
    %34 = arith.subf %30, %33 : vector<8x8xf32>
    %35 = math.exp %34 : vector<8x8xf32>
    %cst_16 = arith.constant dense<0.000000e+00> : vector<8xf32>
    %36 = vector.multi_reduction <add>, %35, %cst_16 [1] : vector<8x8xf32> to vector<8xf32>
    %37 = vector.shape_cast %36 : vector<8xf32> to vector<8x1xf32>
    %38 = tpu.reciprocal %37 {approx = true} : vector<8x1xf32> -> vector<8x1xf32>
    %39 = vector.broadcast %38 : vector<8x1xf32> to vector<8x8xf32>
    %40 = arith.mulf %35, %39 : vector<8x8xf32>
    %cst_17 = arith.constant dense<0.000000e+00> : vector<8x16xf32>
    %41 = tpu.matmul %40, %29, %cst_17 {dimension_numbers = #tpu.dot_dimension_numbers<[1], [0], [0], [1], [0, 0, 1, 1], [], []>} : vector<8x8xf32>, vector<8x16xf32>, vector<8x16xf32> -> vector<8x16xf32>
    %c16 = arith.constant 16 : index
    %c0_18 = arith.constant 0 : index
    %42 = vector.load %arg3[%c16, %c0_18] : memref<64x32xf32, #tpu.memory_space<vmem>>, vector<16x32xf32>
    %cst_19 = arith.constant dense<0.000000e+00> : vector<8x32xf32>
    %43 = tpu.matmul %41, %42, %cst_19 {dimension_numbers = #tpu.dot_dimension_numbers<[1], [0], [0], [1], [0, 0, 1, 1], [], []>} : vector<8x16xf32>, vector<16x32xf32>, vector<8x32xf32> -> vector<8x32xf32>
    %44 = arith.addf %24, %43 : vector<8x32xf32>
    %45 = vector.extract_strided_slice %3 {offsets = [0, 32], sizes = [8, 16], strides = [1, 1]} : vector<8x192xf32> to vector<8x16xf32>
    %cst_20 = arith.constant 2.500000e-01 : f32
    %46 = vector.broadcast %cst_20 : f32 to vector<8x16xf32>
    %47 = arith.mulf %45, %46 : vector<8x16xf32>
    %48 = vector.extract_strided_slice %3 {offsets = [0, 96], sizes = [8, 16], strides = [1, 1]} : vector<8x192xf32> to vector<8x16xf32>
    %49 = vector.extract_strided_slice %3 {offsets = [0, 160], sizes = [8, 16], strides = [1, 1]} : vector<8x192xf32> to vector<8x16xf32>
    %cst_21 = arith.constant dense<0.000000e+00> : vector<8x8xf32>
    %50 = tpu.matmul %47, %48, %cst_21 {dimension_numbers = #tpu.dot_dimension_numbers<[1], [1], [0], [0], [0, 0, 1, 0], [], []>} : vector<8x16xf32>, vector<8x16xf32>, vector<8x8xf32> -> vector<8x8xf32>
    %cst_22 = arith.constant dense<0xFF800000> : vector<8xf32>
    %51 = vector.multi_reduction <maximumf>, %50, %cst_22 [1] : vector<8x8xf32> to vector<8xf32>
    %52 = vector.shape_cast %51 : vector<8xf32> to vector<8x1xf32>
    %53 = vector.broadcast %52 : vector<8x1xf32> to vector<8x8xf32>
    %54 = arith.subf %50, %53 : vector<8x8xf32>
    %55 = math.exp %54 : vector<8x8xf32>
    %cst_23 = arith.constant dense<0.000000e+00> : vector<8xf32>
    %56 = vector.multi_reduction <add>, %55, %cst_23 [1] : vector<8x8xf32> to vector<8xf32>
    %57 = vector.shape_cast %56 : vector<8xf32> to vector<8x1xf32>
    %58 = tpu.reciprocal %57 {approx = true} : vector<8x1xf32> -> vector<8x1xf32>
    %59 = vector.broadcast %58 : vector<8x1xf32> to vector<8x8xf32>
    %60 = arith.mulf %55, %59 : vector<8x8xf32>
    %cst_24 = arith.constant dense<0.000000e+00> : vector<8x16xf32>
    %61 = tpu.matmul %60, %49, %cst_24 {dimension_numbers = #tpu.dot_dimension_numbers<[1], [0], [0], [1], [0, 0, 1, 1], [], []>} : vector<8x8xf32>, vector<8x16xf32>, vector<8x16xf32> -> vector<8x16xf32>
    %c32 = arith.constant 32 : index
    %c0_25 = arith.constant 0 : index
    %62 = vector.load %arg3[%c32, %c0_25] : memref<64x32xf32, #tpu.memory_space<vmem>>, vector<16x32xf32>
    %cst_26 = arith.constant dense<0.000000e+00> : vector<8x32xf32>
    %63 = tpu.matmul %61, %62, %cst_26 {dimension_numbers = #tpu.dot_dimension_numbers<[1], [0], [0], [1], [0, 0, 1, 1], [], []>} : vector<8x16xf32>, vector<16x32xf32>, vector<8x32xf32> -> vector<8x32xf32>
    %64 = arith.addf %44, %63 : vector<8x32xf32>
    %65 = vector.extract_strided_slice %3 {offsets = [0, 48], sizes = [8, 16], strides = [1, 1]} : vector<8x192xf32> to vector<8x16xf32>
    %cst_27 = arith.constant 2.500000e-01 : f32
    %66 = vector.broadcast %cst_27 : f32 to vector<8x16xf32>
    %67 = arith.mulf %65, %66 : vector<8x16xf32>
    %68 = vector.extract_strided_slice %3 {offsets = [0, 112], sizes = [8, 16], strides = [1, 1]} : vector<8x192xf32> to vector<8x16xf32>
    %69 = vector.extract_strided_slice %3 {offsets = [0, 176], sizes = [8, 16], strides = [1, 1]} : vector<8x192xf32> to vector<8x16xf32>
    %cst_28 = arith.constant dense<0.000000e+00> : vector<8x8xf32>
    %70 = tpu.matmul %67, %68, %cst_28 {dimension_numbers = #tpu.dot_dimension_numbers<[1], [1], [0], [0], [0, 0, 1, 0], [], []>} : vector<8x16xf32>, vector<8x16xf32>, vector<8x8xf32> -> vector<8x8xf32>
    %cst_29 = arith.constant dense<0xFF800000> : vector<8xf32>
    %71 = vector.multi_reduction <maximumf>, %70, %cst_29 [1] : vector<8x8xf32> to vector<8xf32>
    %72 = vector.shape_cast %71 : vector<8xf32> to vector<8x1xf32>
    %73 = vector.broadcast %72 : vector<8x1xf32> to vector<8x8xf32>
    %74 = arith.subf %70, %73 : vector<8x8xf32>
    %75 = math.exp %74 : vector<8x8xf32>
    %cst_30 = arith.constant dense<0.000000e+00> : vector<8xf32>
    %76 = vector.multi_reduction <add>, %75, %cst_30 [1] : vector<8x8xf32> to vector<8xf32>
    %77 = vector.shape_cast %76 : vector<8xf32> to vector<8x1xf32>
    %78 = tpu.reciprocal %77 {approx = true} : vector<8x1xf32> -> vector<8x1xf32>
    %79 = vector.broadcast %78 : vector<8x1xf32> to vector<8x8xf32>
    %80 = arith.mulf %75, %79 : vector<8x8xf32>
    %cst_31 = arith.constant dense<0.000000e+00> : vector<8x16xf32>
    %81 = tpu.matmul %80, %69, %cst_31 {dimension_numbers = #tpu.dot_dimension_numbers<[1], [0], [0], [1], [0, 0, 1, 1], [], []>} : vector<8x8xf32>, vector<8x16xf32>, vector<8x16xf32> -> vector<8x16xf32>
    %c48 = arith.constant 48 : index
    %c0_32 = arith.constant 0 : index
    %82 = vector.load %arg3[%c48, %c0_32] : memref<64x32xf32, #tpu.memory_space<vmem>>, vector<16x32xf32>
    %cst_33 = arith.constant dense<0.000000e+00> : vector<8x32xf32>
    %83 = tpu.matmul %81, %82, %cst_33 {dimension_numbers = #tpu.dot_dimension_numbers<[1], [0], [0], [1], [0, 0, 1, 1], [], []>} : vector<8x16xf32>, vector<16x32xf32>, vector<8x32xf32> -> vector<8x32xf32>
    %84 = arith.addf %64, %83 : vector<8x32xf32>
    %c0_34 = arith.constant 0 : index
    %c0_35 = arith.constant 0 : index
    %85 = vector.load %arg4[%c0_34, %c0_35] : memref<1x32xf32, #tpu.memory_space<vmem>>, vector<1x32xf32>
    %86 = vector.broadcast %85 : vector<1x32xf32> to vector<8x32xf32>
    %87 = arith.addf %84, %86 : vector<8x32xf32>
    %c0_36 = arith.constant 0 : index
    %c0_37 = arith.constant 0 : index
    %c0_38 = arith.constant 0 : index
    %88 = vector.load %arg5[%c0_36, %c0_37, %c0_38] : memref<1x8x32xf32, #tpu.memory_space<vmem>>, vector<1x8x32xf32>
    %89 = vector.shape_cast %88 : vector<1x8x32xf32> to vector<8x32xf32>
    %90 = vector.shape_cast %87 : vector<8x32xf32> to vector<1x8x32xf32>
    tpu.vector_store %arg5[%c0_36, %c0_37, %c0_38], %90 {strides = array<i32>} : memref<1x8x32xf32, #tpu.memory_space<vmem>>, vector<1x8x32xf32>,
    return
  }
  func.func @transform_0(%arg0: i32) -> (i32, i32, i32) {
    %c0_i32 = arith.constant 0 : i32
    %c0_i32_0 = arith.constant 0 : i32
    %c0_i32_1 = arith.constant 0 : i32
    return %arg0, %c0_i32, %c0_i32_0 : i32, i32, i32
  }
  func.func @transform_1(%arg0: i32) -> (i32, i32) {
    %c0_i32 = arith.constant 0 : i32
    %c0_i32_0 = arith.constant 0 : i32
    %c0_i32_1 = arith.constant 0 : i32
    return %c0_i32, %c0_i32_0 : i32, i32
  }
  func.func @transform_2(%arg0: i32) -> (i32, i32) {
    %c0_i32 = arith.constant 0 : i32
    %c0_i32_0 = arith.constant 0 : i32
    %c0_i32_1 = arith.constant 0 : i32
    return %c0_i32, %c0_i32_0 : i32, i32
  }
  func.func @transform_3(%arg0: i32) -> (i32, i32) {
    %c0_i32 = arith.constant 0 : i32
    %c0_i32_0 = arith.constant 0 : i32
    %c0_i32_1 = arith.constant 0 : i32
    return %c0_i32, %c0_i32_0 : i32, i32
  }
  func.func @transform_4(%arg0: i32) -> (i32, i32, i32) {
    %c0_i32 = arith.constant 0 : i32
    %c0_i32_0 = arith.constant 0 : i32
    %c0_i32_1 = arith.constant 0 : i32
    return %arg0, %c0_i32, %c0_i32_0 : i32, i32, i32
  }
}

</mosaic_0001>

<llo_original>
// kernel: tpu_custom_call.1
$region0: #{tpu_custom_call.1}
  #allocation0 [shape = 'u32[]', space=smem, size = 0x4, offset = 0x4, fixed_abs, tag = 'smem constant byte address 0x4 - core index']
  #allocation1 [shape = 'u32[72,128]{1,0:T(1,128)}', space=vmem, size = 0x9000, scoped, tag = 'internal scratch']
  %s0 = inlined_call_operand.vmem [shape: f32[2,8,32], index: 0, kind: input, shape index: {}]
  %s1 = inlined_call_operand.vmem [shape: f32[32,192], index: 1, kind: input, shape index: {}]
  %s2 = inlined_call_operand.vmem [shape: f32[64,32], index: 2, kind: input, shape index: {}]
  %s3 = inlined_call_operand.vmem [shape: f32[1,32], index: 3, kind: input, shape index: {}]
  %s4 = inlined_call_operand.hbm [shape: f32[2,8,32], index: 4, kind: output, shape index: {}]
  %s5 = sld [smem:[#allocation0]]
  $region49: #{tpu_custom_call.1} parent=0
    _
  %s7 = ssub.s32 1, %s5
  %s8 = scalar_select 0, %s7, %s5
  $region1: #{tpu_custom_call.1} parent=0
    #allocation2 [shape = 'u8[8192]{0}', space=vmem, size = 0x2000, scoped, tag = 'output window, operand 0']
    #allocation3 [shape = 's32[2]{0}', space=sflag, size = 0x8, scoped, tag = 'scoped memory for tpu_custom_call.1']
    %9 = vsyncpa [#allocation3], 0
    %s10 = scalar_lea.sflag [#allocation3], 1
    %11 = vsyncpa %s10, 0
    loop: start=0, step=1, limit=4
    $region2: #{tpu_custom_call.1} parent=1 // loop_pre_header
      _
    $region3: #{tpu_custom_call.1} parent=1 // loop_header
      %s13 = sphi 0, %s17
      %p14 = scmp.ge.s32.totalorder %s13, 4
      %s23 = sphi 0, %s25
      %s26 = sphi 0, %s23
      %s27 = sphi 0, %s26
      %s43 = sphi 0, %s27
      %s47 = sphi 0, %s47
      %s49 = sphi 0, %s47
      %s50 = sphi 0, %s49
      %s64 = sphi 0, %s50
      %s68 = sphi 0, %s68
      %s70 = sphi 0, %s68
      %s71 = sphi 0, %s70
      %s85 = sphi 0, %s71
      %s89 = sphi 0, %s89
      %s91 = sphi 0, %s89
      %s92 = sphi 0, %s91
      %s106 = sphi 0, %s92
      %s112 = sphi 0, %s114
      %s115 = sphi 0, %s112
      %s116 = sphi 0, %s115
      %s132 = sphi 0, %s116
    $region4: #{tpu_custom_call.1} parent=1 // loop_header_branch
      %16 = sbr.rel (%p14) target = $region8
    $region5: #{tpu_custom_call.1} parent=1 // loop_body
      %s18 = ssub.s32 %s13, 1
      %s19 = ssub.s32 %s13, 2
      %s20 = sadd.s32 %s13, 1
      %s21 = ssub.s32 %s13, %s20
      %p22 = scmp.eq.s32.totalorder %s21, 0
      %s24 = sadd.s32 %s23, 1
      %s25 = scalar_select %p22, %s23, %s24
      %p28 = pneg %p22
      %p29 = scmp.eq.s32.totalorder %s13, 1
      %p30 = por %p28, %p29
      %p31 = scmp.ne.s32.totalorder %s23, %s26
      %p32 = scmp.eq.s32.totalorder %s13, 0
      %p33 = por %p31, %p32
      %p34 = scmp.ne.s32.totalorder %s23, %s26
      %p35 = scmp.eq.s32.totalorder %s18, 1
      %p36 = por %p34, %p35
      %p37 = scmp.ne.s32.totalorder %s26, %s27
      %p38 = scmp.eq.s32.totalorder %s18, 0
      %p39 = por %p37, %p38
      %p40 = scmp.ne.s32.totalorder %s26, %s27
      %p41 = scmp.eq.s32.totalorder %s19, 1
      %p42 = por %p40, %p41
      %p44 = scmp.ne.s32.totalorder %s27, %s43
      %p45 = scmp.eq.s32.totalorder %s19, 0
      %p46 = por %p44, %p45
      %s48 = sadd.s32 %s47, 1
      %p51 = scmp.eq.s32.totalorder %s13, 1
      %p52 = scmp.ne.s32.totalorder %s47, %s49
      %p53 = scmp.eq.s32.totalorder %s13, 0
      %p54 = por %p52, %p53
      %p55 = scmp.ne.s32.totalorder %s47, %s49
      %p56 = scmp.eq.s32.totalorder %s18, 1
      %p57 = por %p55, %p56
      %p58 = scmp.ne.s32.totalorder %s49, %s50
      %p59 = scmp.eq.s32.totalorder %s18, 0
      %p60 = por %p58, %p59
      %p61 = scmp.ne.s32.totalorder %s49, %s50
      %p62 = scmp.eq.s32.totalorder %s19, 1
      %p63 = por %p61, %p62
      %p65 = scmp.ne.s32.totalorder %s50, %s64
      %p66 = scmp.eq.s32.totalorder %s19, 0
      %p67 = por %p65, %p66
      %s69 = sadd.s32 %s68, 1
      %p72 = scmp.eq.s32.totalorder %s13, 1
      %p73 = scmp.ne.s32.totalorder %s68, %s70
      %p74 = scmp.eq.s32.totalorder %s13, 0
      %p75 = por %p73, %p74
      %p76 = scmp.ne.s32.totalorder %s68, %s70
      %p77 = scmp.eq.s32.totalorder %s18, 1
      %p78 = por %p76, %p77
      %p79 = scmp.ne.s32.totalorder %s70, %s71
      %p80 = scmp.eq.s32.totalorder %s18, 0
      %p81 = por %p79, %p80
      %p82 = scmp.ne.s32.totalorder %s70, %s71
      %p83 = scmp.eq.s32.totalorder %s19, 1
      %p84 = por %p82, %p83
      %p86 = scmp.ne.s32.totalorder %s71, %s85
      %p87 = scmp.eq.s32.totalorder %s19, 0
      %p88 = por %p86, %p87
      %s90 = sadd.s32 %s89, 1
      %p93 = scmp.eq.s32.totalorder %s13, 1
      %p94 = scmp.ne.s32.totalorder %s89, %s91
      %p95 = scmp.eq.s32.totalorder %s13, 0
      %p96 = por %p94, %p95
      %p97 = scmp.ne.s32.totalorder %s89, %s91
      %p98 = scmp.eq.s32.totalorder %s18, 1
      %p99 = por %p97, %p98
      %p100 = scmp.ne.s32.totalorder %s91, %s92
      %p101 = scmp.eq.s32.totalorder %s18, 0
      %p102 = por %p100, %p101
      %p103 = scmp.ne.s32.totalorder %s91, %s92
      %p104 = scmp.eq.s32.totalorder %s19, 1
      %p105 = por %p103, %p104
      %p107 = scmp.ne.s32.totalorder %s92, %s106
      %p108 = scmp.eq.s32.totalorder %s19, 0
      %p109 = por %p107, %p108
      %s110 = ssub.s32 %s13, %s20
      %p111 = scmp.eq.s32.totalorder %s110, 0
      %s113 = sadd.s32 %s112, 1
      %s114 = scalar_select %p111, %s112, %s113
      %p117 = pneg %p111
      %p118 = scmp.eq.s32.totalorder %s13, 1
      %p119 = por %p117, %p118
      %p120 = scmp.ne.s32.totalorder %s112, %s115
      %p121 = scmp.eq.s32.totalorder %s13, 0
      %p122 = por %p120, %p121
      %p123 = scmp.ne.s32.totalorder %s112, %s115
      %p124 = scmp.eq.s32.totalorder %s18, 1
      %p125 = por %p123, %p124
      %p126 = scmp.ne.s32.totalorder %s115, %s116
      %p127 = scmp.eq.s32.totalorder %s18, 0
      %p128 = por %p126, %p127
      %p129 = scmp.ne.s32.totalorder %s115, %s116
      %p130 = scmp.eq.s32.totalorder %s19, 1
      %p131 = por %p129, %p130
      %p133 = scmp.ne.s32.totalorder %s116, %s132
      %p134 = scmp.eq.s32.totalorder %s19, 0
      %p135 = por %p133, %p134
      %p136 = scmp.le.s32.totalorder 1, %s13
      %p137 = scmp.lt.s32.totalorder %s13, 3
      %p138 = pnand %p136, %p137
      %p139 = pneg %p138
      // Predicated region
      $region9: #{tpu_custom_call.1} parent=5 // pred_check
        _
      $region10: #{tpu_custom_call.1} parent=5 // pred_check_branch
        %141 = sbr.rel (%p138) target = $region12
      $region11: #{tpu_custom_call.1} parent=5 // pred_region
        %s142 = ssub.s32 %s13, 1
        // Predicated region
        $region13: #{tpu_custom_call.1} parent=11 // pred_check
          %p143 = pneg %p60
        $region14: #{tpu_custom_call.1} parent=11 // pred_check_branch
          %145 = sbr.rel (%p143) target = $region16
        $region15: #{tpu_custom_call.1} parent=11 // pred_region
          _
        $region16: #{tpu_custom_call.1} parent=11 // pred_fallthru
          _
        // Predicated region
        $region17: #{tpu_custom_call.1} parent=11 // pred_check
          %p146 = pneg %p81
        $region18: #{tpu_custom_call.1} parent=11 // pred_check_branch
          %148 = sbr.rel (%p146) target = $region20
        $region19: #{tpu_custom_call.1} parent=11 // pred_region
          _
        $region20: #{tpu_custom_call.1} parent=11 // pred_fallthru
          _
        // Predicated region
        $region21: #{tpu_custom_call.1} parent=11 // pred_check
          %p149 = pneg %p102
        $region22: #{tpu_custom_call.1} parent=11 // pred_check_branch
          %151 = sbr.rel (%p149) target = $region24
        $region23: #{tpu_custom_call.1} parent=11 // pred_region
          _
        $region24: #{tpu_custom_call.1} parent=11 // pred_fallthru
          _
      $region12: #{tpu_custom_call.1} parent=5 // pred_fallthru
        _
      %p152 = scmp.lt.s32.totalorder %s13, 2
      // Predicated region
      $region25: #{tpu_custom_call.1} parent=5 // pred_check
        %p153 = pneg %p152
      $region26: #{tpu_custom_call.1} parent=5 // pred_check_branch
        %155 = sbr.rel (%p153) target = $region28
      $region27: #{tpu_custom_call.1} parent=5 // pred_region
        // Predicated region
        $region29: #{tpu_custom_call.1} parent=27 // pred_check
          %p156 = pneg %p33
        $region30: #{tpu_custom_call.1} parent=27 // pred_check_branch
          %158 = sbr.rel (%p156) target = $region32
        $region31: #{tpu_custom_call.1} parent=27 // pred_region
          %p159 = scmp.lt.s32.totalorder %s13, 1
          %s160 = scalar_select %p159, %s13, 1
          %s161 = smul.addr %s160, 8
          %s162 = scalar_lea.vmem %s0, %s161
        $region32: #{tpu_custom_call.1} parent=27 // pred_fallthru
          _
      $region28: #{tpu_custom_call.1} parent=5 // pred_fallthru
        _
      %p163 = scmp.le.s32.totalorder 1, %s13
      %p164 = scmp.lt.s32.totalorder %s13, 3
      %p165 = pnand %p163, %p164
      %p166 = pneg %p165
      // Predicated region
      $region33: #{tpu_custom_call.1} parent=5 // pred_check
        _
      $region34: #{tpu_custom_call.1} parent=5 // pred_check_branch
        %168 = sbr.rel (%p165) target = $region36
      $region35: #{tpu_custom_call.1} parent=5 // pred_region
        %s169 = ssub.s32 %s13, 1
        %p170 = scmp.lt.s32.totalorder %s18, 1
        %s171 = scalar_select %p170, %s18, 1
        %s172 = smul.addr %s171, 8
        %s173 = scalar_lea.vmem %s0, %s172
        %p174 = pneg %p39
        %p175 = pneg %p36
        %p176 = pneg %p60
        %p177 = pneg %p57
        %p178 = pneg %p81
        %p179 = pneg %p78
        %p180 = pneg %p102
        %p181 = pneg %p99
        %p182 = pneg %p128
        %p183 = pneg %p125
        %s184 = sand.u32 %s115, 1
        %s185 = scalar_lea.sflag [#allocation3], %s184
        %s186 = sand.u32 %s115, 1
        %s187 = smul.addr %s186, 8
        %s188 = scalar_lea.vmem [#allocation2], %s187
        %p189 = scmp.lt.s32.totalorder %s18, 1
        %s190 = scalar_select %p189, %s18, 1
        %s191 = smul.addr %s190, 8
        %s192 = scalar_lea.vmem %s0, %s191
        %v193 = vld [vmem:[%s192] sm:$0xff]
        %v194 = vld [vmem:[%s1] sm:$0xff]
        %v195 = vld [vmem:[%s1 + $0x8] sm:$0xff]
        %v196 = vld [vmem:[%s1 + $0x10] sm:$0xff]
        %v197 = vld [vmem:[%s1 + $0x18] sm:$0xff]
        %v198 = vld [vmem:[%s1 + $0x20] sm:$0xff]
        %v199 = vld [vmem:[%s1 + $0x28] sm:$0xff]
        %v200 = vld [vmem:[%s1 + $0x30] sm:$0xff]
        %v201 = vld [vmem:[%s1 + $0x38] sm:$0xff]
        %vm202 = vcmask 261120
        %v204 = vsel %vm202, %v193, 0
        %206 = vmatpush.msra.mxu0 0.0
        %207 = vmatpush.msra.mxu0 0.0
        %208 = vmatpush.msra.mxu0 0.0
        %209 = vmatpush.msra.mxu0 0.0
        %210 = vmatpush.msra.mxu0 0.0
        %211 = vmatpush.msra.mxu0 0.0
        %212 = vmatpush.msra.mxu0 0.0
        %213 = vmatpush.msra.mxu0 0.0
        %214 = vmatpush.msra.mxu0 0.0
        %215 = vmatpush.msra.mxu0 0.0
        %216 = vmatpush.msra.mxu0 0.0
        %217 = vmatpush.msra.mxu0 0.0
        %218 = vmatpush.msra.mxu0 %v200
        %219 = vmatpush.msra.mxu0 %v198
        %220 = vmatpush.msra.mxu0 %v196
        %221 = vmatpush.msra.mxu0 %v194
        %222 = vmatmul.f32.gmra.mxu0 %v204
        %v223 = vpop.f32.mrf.mxu0
        %v224 = vadd.f32 0.0, %v223
        %225 = vdwg.mxu0
        %226 = vmatpush.msra.mxu0 0.0
        %227 = vmatpush.msra.mxu0 0.0
        %228 = vmatpush.msra.mxu0 0.0
        %229 = vmatpush.msra.mxu0 0.0
        %230 = vmatpush.msra.mxu0 0.0
        %231 = vmatpush.msra.mxu0 0.0
        %232 = vmatpush.msra.mxu0 0.0
        %233 = vmatpush.msra.mxu0 0.0
        %234 = vmatpush.msra.mxu0 0.0
        %235 = vmatpush.msra.mxu0 0.0
        %236 = vmatpush.msra.mxu0 0.0
        %237 = vmatpush.msra.mxu0 0.0
        %238 = vmatpush.msra.mxu0 %v201
        %239 = vmatpush.msra.mxu0 %v199
        %240 = vmatpush.msra.mxu0 %v197
        %241 = vmatpush.msra.mxu0 %v195
        %242 = vmatmul.f32.gmra.mxu0 %v204
        %v243 = vpop.f32.mrf.mxu0
        %v244 = vadd.f32 0.0, %v243
        %245 = vdwg.mxu0
        %v246 = vmul.f32 %v224, 0.25
        %248 = vrot.lane.b32.xlu0 %v224, 64
        %v249 = vpop.permute.xlu0 %248
        %vm250 = vcmask 130048
        %v252 = vsel %vm250, %v246, 0
        %v254 = vsel %vm250, %v249, 0
        %256 = vmatpush.xpose.msra.mxu0 0.0
        %257 = vmatpush.xpose.msra.mxu0 0.0
        %258 = vmatpush.xpose.msra.mxu0 0.0
        %259 = vmatpush.xpose.msra.mxu0 0.0
        %260 = vmatpush.xpose.msra.mxu0 0.0
        %261 = vmatpush.xpose.msra.mxu0 0.0
        %262 = vmatpush.xpose.msra.mxu0 0.0
        %263 = vmatpush.xpose.msra.mxu0 0.0
        %264 = vmatpush.xpose.msra.mxu0 0.0
        %265 = vmatpush.xpose.msra.mxu0 0.0
        %266 = vmatpush.xpose.msra.mxu0 0.0
        %267 = vmatpush.xpose.msra.mxu0 0.0
        %268 = vmatpush.xpose.msra.mxu0 0.0
        %269 = vmatpush.xpose.msra.mxu0 0.0
        %270 = vmatpush.xpose.msra.mxu0 0.0
        %271 = vmatpush.xpose.msra.mxu0 %v254
        %272 = vmatmul.f32.gmra.mxu0 %v252
        %v273 = vpop.f32.mrf.mxu0
        %v274 = vadd.f32 0.0, %v273
        %275 = vdwg.mxu0
        %vm276 = vcmask 64512
        %v277 = vsel %vm276, %v274, -inf
        %278 = vmax.xlane.f32.xlu0 %v277
        %v279 = vpop.xlane.xlu0 %278
        %v280 = vsub.f32 %v274, %v279
        %v281 = vmul.f32 %v280, 1.442695
        %v282 = vpow.pop %v281
        %v283 = vsel %vm276, %v282, 0.0
        %284 = vadd.xlane.f32.xlu0 %v283
        %v285 = vpop.xlane.xlu0 %284
        %v286 = vrcp.pop %v285
        %v287 = vmul.f32 %v282, %v286
        %v289 = vsel %vm276, %v287, 0
        %291 = vmatpush.msra.mxu0 0.0
        %292 = vmatpush.msra.mxu0 0.0
        %293 = vmatpush.msra.mxu0 0.0
        %294 = vmatpush.msra.mxu0 0.0
        %295 = vmatpush.msra.mxu0 0.0
        %296 = vmatpush.msra.mxu0 0.0
        %297 = vmatpush.msra.mxu0 0.0
        %298 = vmatpush.msra.mxu0 0.0
        %299 = vmatpush.msra.mxu0 0.0
        %300 = vmatpush.msra.mxu0 0.0
        %301 = vmatpush.msra.mxu0 0.0
        %302 = vmatpush.msra.mxu0 0.0
        %303 = vmatpush.msra.mxu0 0.0
        %304 = vmatpush.msra.mxu0 0.0
        %305 = vmatpush.msra.mxu0 0.0
        %306 = vmatpush.msra.mxu0 %v244
        %307 = vmatmul.f32.gmra.mxu0 %v289
        %v308 = vpop.f32.mrf.mxu0
        %v309 = vadd.f32 0.0, %v308
        %310 = vdwg.mxu0
        %v311 = vld [vmem:[%s2] sm:$0xff]
        %v312 = vld [vmem:[%s2 + $0x8] sm:$0xff]
        %313 = vrot.lane.b32.xlu0 %v246, 112
        %v314 = vpop.permute.xlu0 %313
        %315 = vrot.lane.b32.xlu0 %v224, 48
        %v316 = vpop.permute.xlu0 %315
        %v317 = vsel %vm250, %v314, 0
        %v319 = vsel %vm250, %v316, 0
        %321 = vmatpush.xpose.msra.mxu0 0.0
        %322 = vmatpush.xpose.msra.mxu0 0.0
        %323 = vmatpush.xpose.msra.mxu0 0.0
        %324 = vmatpush.xpose.msra.mxu0 0.0
        %325 = vmatpush.xpose.msra.mxu0 0.0
        %326 = vmatpush.xpose.msra.mxu0 0.0
        %327 = vmatpush.xpose.msra.mxu0 0.0
        %328 = vmatpush.xpose.msra.mxu0 0.0
        %329 = vmatpush.xpose.msra.mxu0 0.0
        %330 = vmatpush.xpose.msra.mxu0 0.0
        %331 = vmatpush.xpose.msra.mxu0 0.0
        %332 = vmatpush.xpose.msra.mxu0 0.0
        %333 = vmatpush.xpose.msra.mxu0 0.0
        %334 = vmatpush.xpose.msra.mxu0 0.0
        %335 = vmatpush.xpose.msra.mxu0 0.0
        %336 = vmatpush.xpose.msra.mxu0 %v319
        %337 = vmatmul.f32.gmra.mxu0 %v317
        %v338 = vpop.f32.mrf.mxu0
        %v339 = vadd.f32 0.0, %v338
        %340 = vdwg.mxu0
        %v341 = vsel %vm276, %v339, -inf
        %342 = vmax.xlane.f32.xlu0 %v341
        %v343 = vpop.xlane.xlu0 %342
        %v344 = vsub.f32 %v339, %v343
        %v345 = vmul.f32 %v344, 1.442695
        %v346 = vpow.pop %v345
        %v347 = vsel %vm276, %v346, 0.0
        %348 = vadd.xlane.f32.xlu0 %v347
        %v349 = vpop.xlane.xlu0 %348
        %v350 = vrcp.pop %v349
        %v351 = vmul.f32 %v346, %v350
        %353 = vrot.lane.b32.xlu0 %v244, 112
        %v354 = vpop.permute.xlu0 %353
        %v357 = vsel %vm276, %v351, 0
        %359 = vmatpush.msra.mxu0 0.0
        %360 = vmatpush.msra.mxu0 0.0
        %361 = vmatpush.msra.mxu0 0.0
        %362 = vmatpush.msra.mxu0 0.0
        %363 = vmatpush.msra.mxu0 0.0
        %364 = vmatpush.msra.mxu0 0.0
        %365 = vmatpush.msra.mxu0 0.0
        %366 = vmatpush.msra.mxu0 0.0
        %367 = vmatpush.msra.mxu0 0.0
        %368 = vmatpush.msra.mxu0 0.0
        %369 = vmatpush.msra.mxu0 0.0
        %370 = vmatpush.msra.mxu0 0.0
        %371 = vmatpush.msra.mxu0 0.0
        %372 = vmatpush.msra.mxu0 0.0
        %373 = vmatpush.msra.mxu0 0.0
        %374 = vmatpush.msra.mxu0 %v354
        %375 = vmatmul.f32.gmra.mxu0 %v357
        %v376 = vpop.f32.mrf.mxu0
        %v377 = vadd.f32 0.0, %v376
        %378 = vdwg.mxu0
        %v379 = vld [vmem:[%s2 + $0x10] sm:$0xff]
        %v380 = vld [vmem:[%s2 + $0x18] sm:$0xff]
        %v382 = vsel %vm250, %v377, 0
        %384 = vmatpush.msra.mxu0 0.0
        %385 = vmatpush.msra.mxu0 0.0
        %386 = vmatpush.msra.mxu0 0.0
        %387 = vmatpush.msra.mxu0 0.0
        %388 = vmatpush.msra.mxu0 0.0
        %389 = vmatpush.msra.mxu0 0.0
        %390 = vmatpush.msra.mxu0 0.0
        %391 = vmatpush.msra.mxu0 0.0
        %392 = vmatpush.msra.mxu0 0.0
        %393 = vmatpush.msra.mxu0 0.0
        %394 = vmatpush.msra.mxu0 0.0
        %395 = vmatpush.msra.mxu0 0.0
        %396 = vmatpush.msra.mxu0 0.0
        %397 = vmatpush.msra.mxu0 0.0
        %398 = vmatpush.msra.mxu0 %v380
        %399 = vmatpush.msra.mxu0 %v379
        %400 = vmatmul.f32.gmra.mxu0 %v382
        %v401 = vpop.f32.mrf.mxu0
        %v402 = vadd.f32 0.0, %v401
        %403 = vdwg.mxu0
        %v405 = vsel %vm250, %v309, 0
        %407 = vmatpush.msra.mxu0 0.0
        %408 = vmatpush.msra.mxu0 0.0
        %409 = vmatpush.msra.mxu0 0.0
        %410 = vmatpush.msra.mxu0 0.0
        %411 = vmatpush.msra.mxu0 0.0
        %412 = vmatpush.msra.mxu0 0.0
        %413 = vmatpush.msra.mxu0 0.0
        %414 = vmatpush.msra.mxu0 0.0
        %415 = vmatpush.msra.mxu0 0.0
        %416 = vmatpush.msra.mxu0 0.0
        %417 = vmatpush.msra.mxu0 0.0
        %418 = vmatpush.msra.mxu0 0.0
        %419 = vmatpush.msra.mxu0 0.0
        %420 = vmatpush.msra.mxu0 0.0
        %421 = vmatpush.msra.mxu0 %v312
        %422 = vmatpush.msra.mxu0 %v311
        %423 = vmatmul.f32.gmra.mxu0 %v405
        %v424 = vpop.f32.mrf.mxu0
        %v425 = vadd.f32 %v402, %v424
        %426 = vdwg.mxu0
        %427 = vrot.lane.b32.xlu0 %v246, 96
        %v428 = vpop.permute.xlu0 %427
        %429 = vrot.lane.b32.xlu0 %v224, 32
        %v430 = vpop.permute.xlu0 %429
        %v431 = vsel %vm250, %v428, 0
        %v433 = vsel %vm250, %v430, 0
        %435 = vmatpush.xpose.msra.mxu0 0.0
        %436 = vmatpush.xpose.msra.mxu0 0.0
        %437 = vmatpush.xpose.msra.mxu0 0.0
        %438 = vmatpush.xpose.msra.mxu0 0.0
        %439 = vmatpush.xpose.msra.mxu0 0.0
        %440 = vmatpush.xpose.msra.mxu0 0.0
        %441 = vmatpush.xpose.msra.mxu0 0.0
        %442 = vmatpush.xpose.msra.mxu0 0.0
        %443 = vmatpush.xpose.msra.mxu0 0.0
        %444 = vmatpush.xpose.msra.mxu0 0.0
        %445 = vmatpush.xpose.msra.mxu0 0.0
        %446 = vmatpush.xpose.msra.mxu0 0.0
        %447 = vmatpush.xpose.msra.mxu0 0.0
        %448 = vmatpush.xpose.msra.mxu0 0.0
        %449 = vmatpush.xpose.msra.mxu0 0.0
        %450 = vmatpush.xpose.msra.mxu0 %v433
        %451 = vmatmul.f32.gmra.mxu0 %v431
        %v452 = vpop.f32.mrf.mxu0
        %v453 = vadd.f32 0.0, %v452
        %454 = vdwg.mxu0
        %v455 = vsel %vm276, %v453, -inf
        %456 = vmax.xlane.f32.xlu0 %v455
        %v457 = vpop.xlane.xlu0 %456
        %v458 = vsub.f32 %v453, %v457
        %v459 = vmul.f32 %v458, 1.442695
        %v460 = vpow.pop %v459
        %v461 = vsel %vm276, %v460, 0.0
        %462 = vadd.xlane.f32.xlu0 %v461
        %v463 = vpop.xlane.xlu0 %462
        %v464 = vrcp.pop %v463
        %v465 = vmul.f32 %v460, %v464
        %466 = vrot.lane.b32.xlu0 %v244, 96
        %v467 = vpop.permute.xlu0 %466
        %v470 = vsel %vm276, %v465, 0
        %472 = vmatpush.msra.mxu0 0.0
        %473 = vmatpush.msra.mxu0 0.0
        %474 = vmatpush.msra.mxu0 0.0
        %475 = vmatpush.msra.mxu0 0.0
        %476 = vmatpush.msra.mxu0 0.0
        %477 = vmatpush.msra.mxu0 0.0
        %478 = vmatpush.msra.mxu0 0.0
        %479 = vmatpush.msra.mxu0 0.0
        %480 = vmatpush.msra.mxu0 0.0
        %481 = vmatpush.msra.mxu0 0.0
        %482 = vmatpush.msra.mxu0 0.0
        %483 = vmatpush.msra.mxu0 0.0
        %484 = vmatpush.msra.mxu0 0.0
        %485 = vmatpush.msra.mxu0 0.0
        %486 = vmatpush.msra.mxu0 0.0
        %487 = vmatpush.msra.mxu0 %v467
        %488 = vmatmul.f32.gmra.mxu0 %v470
        %v489 = vpop.f32.mrf.mxu0
        %v490 = vadd.f32 0.0, %v489
        %491 = vdwg.mxu0
        %v492 = vld [vmem:[%s2 + $0x20] sm:$0xff]
        %v493 = vld [vmem:[%s2 + $0x28] sm:$0xff]
        %v495 = vsel %vm250, %v490, 0
        %497 = vmatpush.msra.mxu0 0.0
        %498 = vmatpush.msra.mxu0 0.0
        %499 = vmatpush.msra.mxu0 0.0
        %500 = vmatpush.msra.mxu0 0.0
        %501 = vmatpush.msra.mxu0 0.0
        %502 = vmatpush.msra.mxu0 0.0
        %503 = vmatpush.msra.mxu0 0.0
        %504 = vmatpush.msra.mxu0 0.0
        %505 = vmatpush.msra.mxu0 0.0
        %506 = vmatpush.msra.mxu0 0.0
        %507 = vmatpush.msra.mxu0 0.0
        %508 = vmatpush.msra.mxu0 0.0
        %509 = vmatpush.msra.mxu0 0.0
        %510 = vmatpush.msra.mxu0 0.0
        %511 = vmatpush.msra.mxu0 %v493
        %512 = vmatpush.msra.mxu0 %v492
        %513 = vmatmul.f32.gmra.mxu0 %v495
        %v514 = vpop.f32.mrf.mxu0
        %v515 = vadd.f32 0.0, %v514
        %516 = vdwg.mxu0
        %v517 = vadd.f32 %v425, %v515
        %518 = vrot.lane.b32.xlu0 %v246, 80
        %v519 = vpop.permute.xlu0 %518
        %520 = vrot.lane.b32.xlu0 %v224, 16
        %v521 = vpop.permute.xlu0 %520
        %v522 = vsel %vm250, %v519, 0
        %v524 = vsel %vm250, %v521, 0
        %526 = vmatpush.xpose.msra.mxu0 0.0
        %527 = vmatpush.xpose.msra.mxu0 0.0
        %528 = vmatpush.xpose.msra.mxu0 0.0
        %529 = vmatpush.xpose.msra.mxu0 0.0
        %530 = vmatpush.xpose.msra.mxu0 0.0
        %531 = vmatpush.xpose.msra.mxu0 0.0
        %532 = vmatpush.xpose.msra.mxu0 0.0
        %533 = vmatpush.xpose.msra.mxu0 0.0
        %534 = vmatpush.xpose.msra.mxu0 0.0
        %535 = vmatpush.xpose.msra.mxu0 0.0
        %536 = vmatpush.xpose.msra.mxu0 0.0
        %537 = vmatpush.xpose.msra.mxu0 0.0
        %538 = vmatpush.xpose.msra.mxu0 0.0
        %539 = vmatpush.xpose.msra.mxu0 0.0
        %540 = vmatpush.xpose.msra.mxu0 0.0
        %541 = vmatpush.xpose.msra.mxu0 %v524
        %542 = vmatmul.f32.gmra.mxu0 %v522
        %v543 = vpop.f32.mrf.mxu0
        %v544 = vadd.f32 0.0, %v543
        %545 = vdwg.mxu0
        %v546 = vsel %vm276, %v544, -inf
        %547 = vmax.xlane.f32.xlu0 %v546
        %v548 = vpop.xlane.xlu0 %547
        %v549 = vsub.f32 %v544, %v548
        %v550 = vmul.f32 %v549, 1.442695
        %v551 = vpow.pop %v550
        %v552 = vsel %vm276, %v551, 0.0
        %553 = vadd.xlane.f32.xlu0 %v552
        %v554 = vpop.xlane.xlu0 %553
        %v555 = vrcp.pop %v554
        %v556 = vmul.f32 %v551, %v555
        %557 = vrot.lane.b32.xlu0 %v244, 80
        %v558 = vpop.permute.xlu0 %557
        %v561 = vsel %vm276, %v556, 0
        %563 = vmatpush.msra.mxu0 0.0
        %564 = vmatpush.msra.mxu0 0.0
        %565 = vmatpush.msra.mxu0 0.0
        %566 = vmatpush.msra.mxu0 0.0
        %567 = vmatpush.msra.mxu0 0.0
        %568 = vmatpush.msra.mxu0 0.0
        %569 = vmatpush.msra.mxu0 0.0
        %570 = vmatpush.msra.mxu0 0.0
        %571 = vmatpush.msra.mxu0 0.0
        %572 = vmatpush.msra.mxu0 0.0
        %573 = vmatpush.msra.mxu0 0.0
        %574 = vmatpush.msra.mxu0 0.0
        %575 = vmatpush.msra.mxu0 0.0
        %576 = vmatpush.msra.mxu0 0.0
        %577 = vmatpush.msra.mxu0 0.0
        %578 = vmatpush.msra.mxu0 %v558
        %579 = vmatmul.f32.gmra.mxu0 %v561
        %v580 = vpop.f32.mrf.mxu0
        %v581 = vadd.f32 0.0, %v580
        %582 = vdwg.mxu0
        %v583 = vld [vmem:[%s2 + $0x30] sm:$0xff]
        %v584 = vld [vmem:[%s2 + $0x38] sm:$0xff]
        %v586 = vsel %vm250, %v581, 0
        %588 = vmatpush.msra.mxu0 0.0
        %589 = vmatpush.msra.mxu0 0.0
        %590 = vmatpush.msra.mxu0 0.0
        %591 = vmatpush.msra.mxu0 0.0
        %592 = vmatpush.msra.mxu0 0.0
        %593 = vmatpush.msra.mxu0 0.0
        %594 = vmatpush.msra.mxu0 0.0
        %595 = vmatpush.msra.mxu0 0.0
        %596 = vmatpush.msra.mxu0 0.0
        %597 = vmatpush.msra.mxu0 0.0
        %598 = vmatpush.msra.mxu0 0.0
        %599 = vmatpush.msra.mxu0 0.0
        %600 = vmatpush.msra.mxu0 0.0
        %601 = vmatpush.msra.mxu0 0.0
        %602 = vmatpush.msra.mxu0 %v584
        %603 = vmatpush.msra.mxu0 %v583
        %604 = vmatmul.f32.gmra.mxu0 %v586
        %v605 = vpop.f32.mrf.mxu0
        %v606 = vadd.f32 0.0, %v605
        %607 = vdwg.mxu0
        %v608 = vadd.f32 %v517, %v606
        %v609 = vld [vmem:[%s3] sm:$0x1]
        %v611 = vperm.slane %v609, 0
        %v613 = vadd.f32 %v608, %v611
        %614 = vst.msk [vmem:[%s188] sm:$0xff] %vm202, %v613
        %s615 = sand.u32 %s115, 1
        %s616 = scalar_lea.sflag [#allocation3], %s615
        %s617 = sand.u32 %s115, 1
        %s618 = smul.addr %s617, 8
        %s619 = scalar_lea.vmem [#allocation2], %s618
        // Predicated region
        $region37: #{tpu_custom_call.1} parent=35 // pred_check
          %p620 = pneg %p125
        $region38: #{tpu_custom_call.1} parent=35 // pred_check_branch
          %622 = sbr.rel (%p620) target = $region40
        $region39: #{tpu_custom_call.1} parent=35 // pred_region
          %624 = vsyncadd %s616, 0
          %s625 = smul.addr %s18, 8
          %s626 = scalar_lea.hbm %s4, %s625
          %s628 = sshll.u32 %s619, 4
          %s629 = int_to_ptr.vmem [resolvable:$true] %s628
          %s630 = sshll.u32 %s626, 4
          %s631 = int_to_ptr.hbm [resolvable:$true] %s630
          %633 = dma.vmem_to_hbm [thread:$0]  %s629, 128, %s631, %s616
        $region40: #{tpu_custom_call.1} parent=35 // pred_fallthru
          _
      $region36: #{tpu_custom_call.1} parent=5 // pred_fallthru
        _
      %p634 = scmp.le.s32.totalorder 2, %s13
      // Predicated region
      $region41: #{tpu_custom_call.1} parent=5 // pred_check
        %p635 = pneg %p634
      $region42: #{tpu_custom_call.1} parent=5 // pred_check_branch
        %637 = sbr.rel (%p635) target = $region44
      $region43: #{tpu_custom_call.1} parent=5 // pred_region
        %s638 = ssub.s32 %s13, 2
        // Predicated region
        $region45: #{tpu_custom_call.1} parent=43 // pred_check
          %p639 = pneg %p131
        $region46: #{tpu_custom_call.1} parent=43 // pred_check_branch
          %641 = sbr.rel (%p639) target = $region48
        $region47: #{tpu_custom_call.1} parent=43 // pred_region
          %s642 = sand.u32 %s116, 1
          %s643 = scalar_lea.sflag [#allocation3], %s642
          %s644 = sand.u32 %s116, 1
          %s645 = smul.addr %s644, 8
          %s646 = scalar_lea.vmem [#allocation2], %s645
          %648 = dma.done %s643, 128
        $region48: #{tpu_custom_call.1} parent=43 // pred_fallthru
          _
      $region44: #{tpu_custom_call.1} parent=5 // pred_fallthru
        _
    $region6: #{tpu_custom_call.1} parent=1 // loop_footer
      %s17 = sadd.s32 1, %s13
    $region7: #{tpu_custom_call.1} parent=1 // loop_footer_branch
      %12 = sbr.rel target = $region3
    $region8: #{tpu_custom_call.1} parent=1 // loop_exit
      _
    %649 = vsyncpa [#allocation3], 1
    %s650 = scalar_lea.sflag [#allocation3], 1
    %651 = vsyncpa %s650, 1

</llo_original>
